<compile_context>
chip_gen: v6e
topology: v6e:2x2x1
jax: 0.10.0
libtpu: 0.0.40
codegen_flags: <defaults>
</compile_context>

<pallas_src>
import functools

import jax
import jax.numpy as jnp
from jax.experimental import pallas as pl
from jax.experimental.pallas import tpu as pltpu

DIM = 128


def _softplus(x):
    # numerically stable, matches torch.nn.functional.softplus within f32
    return jnp.maximum(x, 0.0) + jnp.log1p(jnp.exp(-jnp.abs(x)))


def posterior_kernel(
    s_dim,
    mxu_dtype,
    # streamed inputs (tiled along batch)
    s_ref,        # (Bb, s_dim)
    a_ref,        # (Bb, a_dim)
    h_ref,        # (Bb, h_dim)
    # prior params (VMEM-resident)
    w1p_s_ref,    # (s_dim, DIM)
    w1p_a_ref,    # (a_dim, DIM)
    b1p_ref,      # (1, DIM)
    wp2_ref,      # (DIM, 2*s_dim)   = [fc21 | fc22] fused
    bp2_ref,      # (1, 2*s_dim)
    # posterior params (VMEM-resident)
    w1q_ls_ref,   # (2*s_dim, DIM)   rows for the [loc | scale] input slab
    w1q_h_ref,    # (h_dim, DIM)     rows for the h input
    b1q_ref,      # (1, DIM)
    wq2_ref,      # (DIM, 2*s_dim)   = [fc21 | fc22] fused
    bq2_ref,      # (1, 2*s_dim)
    # output
    out_ref,      # (Bb, 2*s_dim)    = [loc | scale] fused, split in wrapper
):
    f32 = jnp.float32

    def mm(act, w_ref):
        # MXU operands in mxu_dtype (bf16 fast path on v6e/v7x), f32 accumulate.
        return jnp.dot(act.astype(mxu_dtype), w_ref[...],
                       preferred_element_type=f32)

    # ---- prior: hp = relu(cat[s_prev, a] @ W1p + b1p) == s@W1p_s + a@W1p_a ----
    hp = jnp.maximum(
        mm(s_ref[...], w1p_s_ref) + mm(a_ref[...], w1p_a_ref) + b1p_ref[...],
        0.0,
    )
    # fused fc21|fc22: single N=2*s_dim matmul, per-lane loc/softplus split (f32)
    prior_pre = mm(hp, wp2_ref) + bp2_ref[...]
    lane = jax.lax.broadcasted_iota(jnp.int32, prior_pre.shape, 1)
    is_loc = lane < s_dim
    prior_act = jnp.where(is_loc, prior_pre, _softplus(prior_pre))  # [loc|scale]

    # ---- posterior: cat([loc, scale, h]) @ W1q == act @ W1q_ls + h @ W1q_h ----
    hq = jnp.maximum(
        mm(prior_act, w1q_ls_ref) + mm(h_ref[...], w1q_h_ref) + b1q_ref[...],
        0.0,
    )
    out_pre = mm(hq, wq2_ref) + bq2_ref[...]
    out_ref[...] = jnp.where(is_loc, out_pre, _softplus(out_pre))


def _round_up(x, m):
    return ((x + m - 1) // m) * m


def _choose_block_b(B, cap=2048):
    # cap=2048 keeps f32 row tiles inside v5e's 16 MiB default scoped VMEM;
    # aiming for >= 2 grid steps lets v7x's two TensorCores both take work.
    if B <= 8:
        return B
    return max(8, min(cap, _round_up(pl.cdiv(B, 2), 8)))


WEIGHT_ORDER = ("w1p_s", "w1p_a", "b1p", "wp2", "bp2",
                "w1q_ls", "w1q_h", "b1q", "wq2", "bq2")


def posterior_forward(s_prev, a, h, params, *, block_b=None,
                      mxu_dtype=jnp.float32):
    B, s_dim = s_prev.shape
    a_dim = a.shape[1]
    h_dim = h.shape[1]

    if block_b is None:
        block_b = _choose_block_b(B)
    grid = (pl.cdiv(B, block_b),)

    def row_spec(cols):
        return pl.BlockSpec((block_b, cols), lambda i: (i, 0))

    def resident(arr):
        # full array, same block every grid step -> stays VMEM-resident
        return pl.BlockSpec(arr.shape, lambda i: (0, 0))

    # Weights (names starting with 'w') carried in the MXU operand dtype;
    # biases stay f32 (added in the f32 epilogue).
    weights = tuple(
        params[k].astype(mxu_dtype) if k.startswith("w") else params[k]
        for k in WEIGHT_ORDER
    )

    # Advisory cost estimate for XLA's scheduler.
    flops = 2 * B * ((s_dim + a_dim) * DIM + DIM * 2 * s_dim
                     + (2 * s_dim + h_dim) * DIM + DIM * 2 * s_dim)
    transcendentals = 4 * B * s_dim  # exp + log per softplus lane, two stages
    weight_bytes = sum(int(w.size) * w.dtype.itemsize for w in weights)
    io_bytes = B * (s_dim + a_dim + h_dim + 2 * s_dim) * 4
    cost = pl.CostEstimate(flops=flops, transcendentals=transcendentals,
                           bytes_accessed=io_bytes + weight_bytes)

    out = pl.pallas_call(
        functools.partial(posterior_kernel, s_dim, mxu_dtype),
        out_shape=jax.ShapeDtypeStruct((B, 2 * s_dim), jnp.float32),
        grid=grid,
        in_specs=[row_spec(s_dim), row_spec(a_dim), row_spec(h_dim)]
        + [resident(w) for w in weights],
        out_specs=pl.BlockSpec((block_b, 2 * s_dim), lambda i: (i, 0)),
        compiler_params=pltpu.CompilerParams(
            dimension_semantics=("parallel",)
        ),
        cost_estimate=cost,
    )(s_prev, a, h, *weights)

    return out[:, :s_dim], out[:, s_dim:]


def init_params(key, s_dim, a_dim, h_dim):
    """PyTorch-nn.Linear-style init; weights stored as [in, out], fused/split."""

    def linear(key, fan_in, fan_out):
        kw, kb = jax.random.split(key)
        bound = 1.0 / jnp.sqrt(fan_in)
        w = jax.random.uniform(kw, (fan_in, fan_out), jnp.float32, -bound, bound)
        b = jax.random.uniform(kb, (1, fan_out), jnp.float32, -bound, bound)
        return w, b

    keys = jax.random.split(key, 6)
    # prior fc1 : in = s_dim + a_dim
    w1p, b1p = linear(keys[0], s_dim + a_dim, DIM)
    w21p, b21p = linear(keys[1], DIM, s_dim)
    w22p, b22p = linear(keys[2], DIM, s_dim)
    # posterior fc1 : in = 2*s_dim + h_dim
    w1q, b1q = linear(keys[3], 2 * s_dim + h_dim, DIM)
    w21q, b21q = linear(keys[4], DIM, s_dim)
    w22q, b22q = linear(keys[5], DIM, s_dim)

    return {
        # prior fc1 rows split by input: s_prev block and a block
        "w1p_s": w1p[:s_dim],
        "w1p_a": w1p[s_dim:],
        "b1p": b1p,
        # fuse prior fc21 | fc22 along the output axis -> (DIM, 2*s_dim)
        "wp2": jnp.concatenate([w21p, w22p], axis=1),
        "bp2": jnp.concatenate([b21p, b22p], axis=1),
        # split posterior fc1 rows: [loc | scale] block and h block
        "w1q_ls": w1q[: 2 * s_dim],
        "w1q_h": w1q[2 * s_dim:],
        "b1q": b1q,
        # fuse posterior fc21 | fc22 -> (DIM, 2*s_dim)
        "wq2": jnp.concatenate([w21q, w22q], axis=1),
        "bq2": jnp.concatenate([b21q, b22q], axis=1),
    }


def posterior_reference(s_prev, a, h, p):
    """Pure-JAX f32 reference reproducing the PyTorch semantics."""
    s_dim = s_prev.shape[1]
    w1p = jnp.concatenate([p["w1p_s"], p["w1p_a"]], axis=0)
    x = jnp.concatenate([s_prev, a], axis=1)
    hp = jax.nn.relu(x @ w1p + p["b1p"])
    loc_p = hp @ p["wp2"][:, :s_dim] + p["bp2"][:, :s_dim]
    scale_p = jax.nn.softplus(hp @ p["wp2"][:, s_dim:] + p["bp2"][:, s_dim:])

    y = jnp.concatenate([loc_p, scale_p, h], axis=1)
    w1q = jnp.concatenate([p["w1q_ls"], p["w1q_h"]], axis=0)
    hq = jax.nn.relu(y @ w1q + p["b1q"])
    loc = hq @ p["wq2"][:, :s_dim] + p["bq2"][:, :s_dim]
    scale = jax.nn.softplus(hq @ p["wq2"][:, s_dim:] + p["bq2"][:, s_dim:])
    return loc, scale


if __name__ == "__main__":
    B, s_dim, a_dim, h_dim = 16, 32, 8, 32

    key = jax.random.PRNGKey(0)
    k_s, k_a, k_h, k_p = jax.random.split(key, 4)
    s_prev = jax.random.normal(k_s, (B, s_dim), jnp.float32)
    a = jax.random.normal(k_a, (B, a_dim), jnp.float32)
    h = jax.random.normal(k_h, (B, h_dim), jnp.float32)
    params = init_params(k_p, s_dim, a_dim, h_dim)

    loc_ref, scale_ref = posterior_reference(s_prev, a, h, params)

    # f32-operand path: bit-tight against the reference.
    loc, scale = posterior_forward(s_prev, a, h, params)
    jax.block_until_ready((loc, scale))
    assert loc.shape == (B, s_dim) and scale.shape == (B, s_dim)
    assert jnp.allclose(loc, loc_ref, atol=1e-5, rtol=1e-5)
    assert jnp.allclose(scale, scale_ref, atol=1e-5, rtol=1e-5)

    # bf16 MXU-operand path (v6e/v7x fast path), f32 accumulation + epilogues.
    loc_bf, scale_bf = posterior_forward(s_prev, a, h, params,
                                         mxu_dtype=jnp.bfloat16)
    jax.block_until_ready((loc_bf, scale_bf))
    assert jnp.allclose(loc_bf, loc_ref, atol=5e-2, rtol=5e-2)
    assert jnp.allclose(scale_bf, scale_ref, atol=5e-2, rtol=5e-2)

    print("KERNEL_OK")
</pallas_src>

<mosaic_0001>
module attributes {stable_mosaic.version = 11 : i64} {
  func.func @posterior_kernel(%arg0: i32, %arg1: memref<8x32xf32, #tpu.memory_space<vmem>>, %arg2: memref<8x8xf32, #tpu.memory_space<vmem>>, %arg3: memref<8x32xf32, #tpu.memory_space<vmem>>, %arg4: memref<32x128xf32, #tpu.memory_space<vmem>>, %arg5: memref<8x128xf32, #tpu.memory_space<vmem>>, %arg6: memref<1x128xf32, #tpu.memory_space<vmem>>, %arg7: memref<128x64xf32, #tpu.memory_space<vmem>>, %arg8: memref<1x64xf32, #tpu.memory_space<vmem>>, %arg9: memref<64x128xf32, #tpu.memory_space<vmem>>, %arg10: memref<32x128xf32, #tpu.memory_space<vmem>>, %arg11: memref<1x128xf32, #tpu.memory_space<vmem>>, %arg12: memref<128x64xf32, #tpu.memory_space<vmem>>, %arg13: memref<1x64xf32, #tpu.memory_space<vmem>>, %arg14: memref<8x64xf32, #tpu.memory_space<vmem>>) attributes {dimension_semantics = [#tpu.dimension_semantics<parallel>], iteration_bounds = array<i64: 2>, scalar_prefetch = 0 : i64, scratch_operands = 0 : i64, tpu.core_type = #tpu.core_type<tc>, window_params = [{transform_indices = @transform_0, window_bounds = array<i64: 8, 32>}, {transform_indices = @transform_1, window_bounds = array<i64: 8, 8>}, {transform_indices = @transform_2, window_bounds = array<i64: 8, 32>}, {pipeline_mode = #tpu.pipeline_mode<synchronous>, transform_indices = @transform_3, window_bounds = array<i64: 32, 128>}, {pipeline_mode = #tpu.pipeline_mode<synchronous>, transform_indices = @transform_4, window_bounds = array<i64: 8, 128>}, {pipeline_mode = #tpu.pipeline_mode<synchronous>, transform_indices = @transform_5, window_bounds = array<i64: 1, 128>}, {pipeline_mode = #tpu.pipeline_mode<synchronous>, transform_indices = @transform_6, window_bounds = array<i64: 128, 64>}, {pipeline_mode = #tpu.pipeline_mode<synchronous>, transform_indices = @transform_7, window_bounds = array<i64: 1, 64>}, {pipeline_mode = #tpu.pipeline_mode<synchronous>, transform_indices = @transform_8, window_bounds = array<i64: 64, 128>}, {pipeline_mode = #tpu.pipeline_mode<synchronous>, transform_indices = @transform_9, window_bounds = array<i64: 32, 128>}, {pipeline_mode = #tpu.pipeline_mode<synchronous>, transform_indices = @transform_10, window_bounds = array<i64: 1, 128>}, {pipeline_mode = #tpu.pipeline_mode<synchronous>, transform_indices = @transform_11, window_bounds = array<i64: 128, 64>}, {pipeline_mode = #tpu.pipeline_mode<synchronous>, transform_indices = @transform_12, window_bounds = array<i64: 1, 64>}, {transform_indices = @transform_13, window_bounds = array<i64: 8, 64>}]} {
    %c0 = arith.constant 0 : index
    %c0_0 = arith.constant 0 : index
    %0 = vector.load %arg1[%c0, %c0_0] : memref<8x32xf32, #tpu.memory_space<vmem>>, vector<8x32xf32>
    %c0_1 = arith.constant 0 : index
    %c0_2 = arith.constant 0 : index
    %1 = vector.load %arg4[%c0_1, %c0_2] : memref<32x128xf32, #tpu.memory_space<vmem>>, vector<32x128xf32>
    %cst = arith.constant dense<0.000000e+00> : vector<8x128xf32>
    %2 = tpu.matmul %0, %1, %cst {dimension_numbers = #tpu.dot_dimension_numbers<[1], [0], [0], [1], [0, 0, 1, 1], [], []>} : vector<8x32xf32>, vector<32x128xf32>, vector<8x128xf32> -> vector<8x128xf32>
    %c0_3 = arith.constant 0 : index
    %c0_4 = arith.constant 0 : index
    %3 = vector.load %arg2[%c0_3, %c0_4] : memref<8x8xf32, #tpu.memory_space<vmem>>, vector<8x8xf32>
    %c0_5 = arith.constant 0 : index
    %c0_6 = arith.constant 0 : index
    %4 = vector.load %arg5[%c0_5, %c0_6] : memref<8x128xf32, #tpu.memory_space<vmem>>, vector<8x128xf32>
    %cst_7 = arith.constant dense<0.000000e+00> : vector<8x128xf32>
    %5 = tpu.matmul %3, %4, %cst_7 {dimension_numbers = #tpu.dot_dimension_numbers<[1], [0], [0], [1], [0, 0, 1, 1], [], []>} : vector<8x8xf32>, vector<8x128xf32>, vector<8x128xf32> -> vector<8x128xf32>
    %6 = arith.addf %2, %5 : vector<8x128xf32>
    %c0_8 = arith.constant 0 : index
    %c0_9 = arith.constant 0 : index
    %7 = vector.load %arg6[%c0_8, %c0_9] : memref<1x128xf32, #tpu.memory_space<vmem>>, vector<1x128xf32>
    %8 = vector.broadcast %7 : vector<1x128xf32> to vector<8x128xf32>
    %9 = arith.addf %6, %8 : vector<8x128xf32>
    %cst_10 = arith.constant 0.000000e+00 : f32
    %10 = vector.broadcast %cst_10 : f32 to vector<8x128xf32>
    %11 = arith.maximumf %9, %10 : vector<8x128xf32>
    %c0_11 = arith.constant 0 : index
    %c0_12 = arith.constant 0 : index
    %12 = vector.load %arg7[%c0_11, %c0_12] : memref<128x64xf32, #tpu.memory_space<vmem>>, vector<128x64xf32>
    %cst_13 = arith.constant dense<0.000000e+00> : vector<8x64xf32>
    %13 = tpu.matmul %11, %12, %cst_13 {dimension_numbers = #tpu.dot_dimension_numbers<[1], [0], [0], [1], [0, 0, 1, 1], [], []>} : vector<8x128xf32>, vector<128x64xf32>, vector<8x64xf32> -> vector<8x64xf32>
    %c0_14 = arith.constant 0 : index
    %c0_15 = arith.constant 0 : index
    %14 = vector.load %arg8[%c0_14, %c0_15] : memref<1x64xf32, #tpu.memory_space<vmem>>, vector<1x64xf32>
    %15 = vector.broadcast %14 : vector<1x64xf32> to vector<8x64xf32>
    %16 = arith.addf %13, %15 : vector<8x64xf32>
    %17 = tpu.iota {dimensions = array<i32: 1>} : vector<8x64xi32>
    %c32_i32 = arith.constant 32 : i32
    %18 = vector.broadcast %c32_i32 : i32 to vector<8x64xi32>
    %19 = arith.cmpi slt, %17, %18 : vector<8x64xi32>
    %cst_16 = arith.constant 0.000000e+00 : f32
    %20 = vector.broadcast %cst_16 : f32 to vector<8x64xf32>
    %21 = arith.maximumf %16, %20 : vector<8x64xf32>
    %22 = math.absf %16 : vector<8x64xf32>
    %cst_17 = arith.constant 0.000000e+00 : f32
    %23 = vector.broadcast %cst_17 : f32 to vector<8x64xf32>
    %24 = arith.subf %23, %22 : vector<8x64xf32>
    %25 = math.exp %24 : vector<8x64xf32>
    %26 = math.log1p %25 : vector<8x64xf32>
    %27 = arith.addf %21, %26 : vector<8x64xf32>
    %28 = arith.select %19, %16, %27 : vector<8x64xi1>, vector<8x64xf32>
    %c0_18 = arith.constant 0 : index
    %c0_19 = arith.constant 0 : index
    %29 = vector.load %arg9[%c0_18, %c0_19] : memref<64x128xf32, #tpu.memory_space<vmem>>, vector<64x128xf32>
    %cst_20 = arith.constant dense<0.000000e+00> : vector<8x128xf32>
    %30 = tpu.matmul %28, %29, %cst_20 {dimension_numbers = #tpu.dot_dimension_numbers<[1], [0], [0], [1], [0, 0, 1, 1], [], []>} : vector<8x64xf32>, vector<64x128xf32>, vector<8x128xf32> -> vector<8x128xf32>
    %c0_21 = arith.constant 0 : index
    %c0_22 = arith.constant 0 : index
    %31 = vector.load %arg3[%c0_21, %c0_22] : memref<8x32xf32, #tpu.memory_space<vmem>>, vector<8x32xf32>
    %c0_23 = arith.constant 0 : index
    %c0_24 = arith.constant 0 : index
    %32 = vector.load %arg10[%c0_23, %c0_24] : memref<32x128xf32, #tpu.memory_space<vmem>>, vector<32x128xf32>
    %cst_25 = arith.constant dense<0.000000e+00> : vector<8x128xf32>
    %33 = tpu.matmul %31, %32, %cst_25 {dimension_numbers = #tpu.dot_dimension_numbers<[1], [0], [0], [1], [0, 0, 1, 1], [], []>} : vector<8x32xf32>, vector<32x128xf32>, vector<8x128xf32> -> vector<8x128xf32>
    %34 = arith.addf %30, %33 : vector<8x128xf32>
    %c0_26 = arith.constant 0 : index
    %c0_27 = arith.constant 0 : index
    %35 = vector.load %arg11[%c0_26, %c0_27] : memref<1x128xf32, #tpu.memory_space<vmem>>, vector<1x128xf32>
    %36 = vector.broadcast %35 : vector<1x128xf32> to vector<8x128xf32>
    %37 = arith.addf %34, %36 : vector<8x128xf32>
    %cst_28 = arith.constant 0.000000e+00 : f32
    %38 = vector.broadcast %cst_28 : f32 to vector<8x128xf32>
    %39 = arith.maximumf %37, %38 : vector<8x128xf32>
    %c0_29 = arith.constant 0 : index
    %c0_30 = arith.constant 0 : index
    %40 = vector.load %arg12[%c0_29, %c0_30] : memref<128x64xf32, #tpu.memory_space<vmem>>, vector<128x64xf32>
    %cst_31 = arith.constant dense<0.000000e+00> : vector<8x64xf32>
    %41 = tpu.matmul %39, %40, %cst_31 {dimension_numbers = #tpu.dot_dimension_numbers<[1], [0], [0], [1], [0, 0, 1, 1], [], []>} : vector<8x128xf32>, vector<128x64xf32>, vector<8x64xf32> -> vector<8x64xf32>
    %c0_32 = arith.constant 0 : index
    %c0_33 = arith.constant 0 : index
    %42 = vector.load %arg13[%c0_32, %c0_33] : memref<1x64xf32, #tpu.memory_space<vmem>>, vector<1x64xf32>
    %43 = vector.broadcast %42 : vector<1x64xf32> to vector<8x64xf32>
    %44 = arith.addf %41, %43 : vector<8x64xf32>
    %cst_34 = arith.constant 0.000000e+00 : f32
    %45 = vector.broadcast %cst_34 : f32 to vector<8x64xf32>
    %46 = arith.maximumf %44, %45 : vector<8x64xf32>
    %47 = math.absf %44 : vector<8x64xf32>
    %cst_35 = arith.constant 0.000000e+00 : f32
    %48 = vector.broadcast %cst_35 : f32 to vector<8x64xf32>
    %49 = arith.subf %48, %47 : vector<8x64xf32>
    %50 = math.exp %49 : vector<8x64xf32>
    %51 = math.log1p %50 : vector<8x64xf32>
    %52 = arith.addf %46, %51 : vector<8x64xf32>
    %53 = arith.select %19, %44, %52 : vector<8x64xi1>, vector<8x64xf32>
    %c0_36 = arith.constant 0 : index
    %c0_37 = arith.constant 0 : index
    %54 = vector.load %arg14[%c0_36, %c0_37] : memref<8x64xf32, #tpu.memory_space<vmem>>, vector<8x64xf32>
    tpu.vector_store %arg14[%c0_36, %c0_37], %53 {strides = array<i32>} : memref<8x64xf32, #tpu.memory_space<vmem>>, vector<8x64xf32>,
    return
  }
  func.func @transform_0(%arg0: i32) -> (i32, i32) {
    %c0_i32 = arith.constant 0 : i32
    %c0_i32_0 = arith.constant 0 : i32
    return %arg0, %c0_i32 : i32, i32
  }
  func.func @transform_1(%arg0: i32) -> (i32, i32) {
    %c0_i32 = arith.constant 0 : i32
    %c0_i32_0 = arith.constant 0 : i32
    return %arg0, %c0_i32 : i32, i32
  }
  func.func @transform_2(%arg0: i32) -> (i32, i32) {
    %c0_i32 = arith.constant 0 : i32
    %c0_i32_0 = arith.constant 0 : i32
    return %arg0, %c0_i32 : i32, i32
  }
  func.func @transform_3(%arg0: i32) -> (i32, i32) {
    %c0_i32 = arith.constant 0 : i32
    %c0_i32_0 = arith.constant 0 : i32
    %c0_i32_1 = arith.constant 0 : i32
    return %c0_i32, %c0_i32_0 : i32, i32
  }
  func.func @transform_4(%arg0: i32) -> (i32, i32) {
    %c0_i32 = arith.constant 0 : i32
    %c0_i32_0 = arith.constant 0 : i32
    %c0_i32_1 = arith.constant 0 : i32
    return %c0_i32, %c0_i32_0 : i32, i32
  }
  func.func @transform_5(%arg0: i32) -> (i32, i32) {
    %c0_i32 = arith.constant 0 : i32
    %c0_i32_0 = arith.constant 0 : i32
    %c0_i32_1 = arith.constant 0 : i32
    return %c0_i32, %c0_i32_0 : i32, i32
  }
  func.func @transform_6(%arg0: i32) -> (i32, i32) {
    %c0_i32 = arith.constant 0 : i32
    %c0_i32_0 = arith.constant 0 : i32
    %c0_i32_1 = arith.constant 0 : i32
    return %c0_i32, %c0_i32_0 : i32, i32
  }
  func.func @transform_7(%arg0: i32) -> (i32, i32) {
    %c0_i32 = arith.constant 0 : i32
    %c0_i32_0 = arith.constant 0 : i32
    %c0_i32_1 = arith.constant 0 : i32
    return %c0_i32, %c0_i32_0 : i32, i32
  }
  func.func @transform_8(%arg0: i32) -> (i32, i32) {
    %c0_i32 = arith.constant 0 : i32
    %c0_i32_0 = arith.constant 0 : i32
    %c0_i32_1 = arith.constant 0 : i32
    return %c0_i32, %c0_i32_0 : i32, i32
  }
  func.func @transform_9(%arg0: i32) -> (i32, i32) {
    %c0_i32 = arith.constant 0 : i32
    %c0_i32_0 = arith.constant 0 : i32
    %c0_i32_1 = arith.constant 0 : i32
    return %c0_i32, %c0_i32_0 : i32, i32
  }
  func.func @transform_10(%arg0: i32) -> (i32, i32) {
    %c0_i32 = arith.constant 0 : i32
    %c0_i32_0 = arith.constant 0 : i32
    %c0_i32_1 = arith.constant 0 : i32
    return %c0_i32, %c0_i32_0 : i32, i32
  }
  func.func @transform_11(%arg0: i32) -> (i32, i32) {
    %c0_i32 = arith.constant 0 : i32
    %c0_i32_0 = arith.constant 0 : i32
    %c0_i32_1 = arith.constant 0 : i32
    return %c0_i32, %c0_i32_0 : i32, i32
  }
  func.func @transform_12(%arg0: i32) -> (i32, i32) {
    %c0_i32 = arith.constant 0 : i32
    %c0_i32_0 = arith.constant 0 : i32
    %c0_i32_1 = arith.constant 0 : i32
    return %c0_i32, %c0_i32_0 : i32, i32
  }
  func.func @transform_13(%arg0: i32) -> (i32, i32) {
    %c0_i32 = arith.constant 0 : i32
    %c0_i32_0 = arith.constant 0 : i32
    return %arg0, %c0_i32 : i32, i32
  }
}

</mosaic_0001>

<llo_original>
// kernel: tpu_custom_call.1
$region0: #{tpu_custom_call.1}
  #allocation0 [shape = 'u32[]', space=smem, size = 0x4, offset = 0x4, fixed_abs, tag = 'smem constant byte address 0x4 - core index']
  #allocation1 [shape = 'u32[144,128]{1,0:T(1,128)}', space=vmem, size = 0x12000, scoped, tag = 'internal scratch']
  %s0 = inlined_call_operand.vmem [shape: f32[16,32], index: 0, kind: input, shape index: {}]
  %s1 = inlined_call_operand.vmem [shape: f32[16,8], index: 1, kind: input, shape index: {}]
  %s2 = inlined_call_operand.vmem [shape: f32[16,32], index: 2, kind: input, shape index: {}]
  %s3 = inlined_call_operand.vmem [shape: f32[32,128], index: 3, kind: input, shape index: {}]
  %s4 = inlined_call_operand.vmem [shape: f32[8,128], index: 4, kind: input, shape index: {}]
  %s5 = inlined_call_operand.vmem [shape: f32[1,128], index: 5, kind: input, shape index: {}]
  %s6 = inlined_call_operand.vmem [shape: f32[128,64], index: 6, kind: input, shape index: {}]
  %s7 = inlined_call_operand.vmem [shape: f32[1,64], index: 7, kind: input, shape index: {}]
  %s8 = inlined_call_operand.vmem [shape: f32[64,128], index: 8, kind: input, shape index: {}]
  %s9 = inlined_call_operand.vmem [shape: f32[32,128], index: 9, kind: input, shape index: {}]
  %s10 = inlined_call_operand.vmem [shape: f32[1,128], index: 10, kind: input, shape index: {}]
  %s11 = inlined_call_operand.vmem [shape: f32[128,64], index: 11, kind: input, shape index: {}]
  %s12 = inlined_call_operand.vmem [shape: f32[1,64], index: 12, kind: input, shape index: {}]
  %s13 = inlined_call_operand.hbm [shape: f32[16,64], index: 13, kind: output, shape index: {}]
  %s14 = sld [smem:[#allocation0]]
  $region85: #{tpu_custom_call.1} parent=0
    _
  %s16 = ssub.s32 1, %s14
  %s17 = scalar_select 0, %s16, %s14
  $region1: #{tpu_custom_call.1} parent=0
    #allocation2 [shape = 'u8[8192]{0}', space=vmem, size = 0x2000, scoped, tag = 'output window, operand 0']
    #allocation3 [shape = 's32[2]{0}', space=sflag, size = 0x8, scoped, tag = 'scoped memory for tpu_custom_call.1']
    %18 = vsyncpa [#allocation3], 0
    %s19 = scalar_lea.sflag [#allocation3], 1
    %20 = vsyncpa %s19, 0
    loop: start=0, step=1, limit=4
    $region2: #{tpu_custom_call.1} parent=1 // loop_pre_header
      _
    $region3: #{tpu_custom_call.1} parent=1 // loop_header
      %s22 = sphi 0, %s26
      %p23 = scmp.ge.s32.totalorder %s22, 4
      %s32 = sphi 0, %s34
      %s35 = sphi 0, %s32
      %s36 = sphi 0, %s35
      %s52 = sphi 0, %s36
      %s58 = sphi 0, %s60
      %s61 = sphi 0, %s58
      %s62 = sphi 0, %s61
      %s78 = sphi 0, %s62
      %s84 = sphi 0, %s86
      %s87 = sphi 0, %s84
      %s88 = sphi 0, %s87
      %s104 = sphi 0, %s88
      %s108 = sphi 0, %s108
      %s110 = sphi 0, %s108
      %s111 = sphi 0, %s110
      %s125 = sphi 0, %s111
      %s129 = sphi 0, %s129
      %s131 = sphi 0, %s129
      %s132 = sphi 0, %s131
      %s146 = sphi 0, %s132
      %s150 = sphi 0, %s150
      %s152 = sphi 0, %s150
      %s153 = sphi 0, %s152
      %s167 = sphi 0, %s153
      %s171 = sphi 0, %s171
      %s173 = sphi 0, %s171
      %s174 = sphi 0, %s173
      %s188 = sphi 0, %s174
      %s192 = sphi 0, %s192
      %s194 = sphi 0, %s192
      %s195 = sphi 0, %s194
      %s209 = sphi 0, %s195
      %s213 = sphi 0, %s213
      %s215 = sphi 0, %s213
      %s216 = sphi 0, %s215
      %s230 = sphi 0, %s216
      %s234 = sphi 0, %s234
      %s236 = sphi 0, %s234
      %s237 = sphi 0, %s236
      %s251 = sphi 0, %s237
      %s255 = sphi 0, %s255
      %s257 = sphi 0, %s255
      %s258 = sphi 0, %s257
      %s272 = sphi 0, %s258
      %s276 = sphi 0, %s276
      %s278 = sphi 0, %s276
      %s279 = sphi 0, %s278
      %s293 = sphi 0, %s279
      %s297 = sphi 0, %s297
      %s299 = sphi 0, %s297
      %s300 = sphi 0, %s299
      %s314 = sphi 0, %s300
      %s320 = sphi 0, %s322
      %s323 = sphi 0, %s320
      %s324 = sphi 0, %s323
      %s340 = sphi 0, %s324
    $region4: #{tpu_custom_call.1} parent=1 // loop_header_branch
      %25 = sbr.rel (%p23) target = $region8
    $region5: #{tpu_custom_call.1} parent=1 // loop_body
      %s27 = ssub.s32 %s22, 1
      %s28 = ssub.s32 %s22, 2
      %s29 = sadd.s32 %s22, 1
      %s30 = ssub.s32 %s22, %s29
      %p31 = scmp.eq.s32.totalorder %s30, 0
      %s33 = sadd.s32 %s32, 1
      %s34 = scalar_select %p31, %s32, %s33
      %p37 = pneg %p31
      %p38 = scmp.eq.s32.totalorder %s22, 1
      %p39 = por %p37, %p38
      %p40 = scmp.ne.s32.totalorder %s32, %s35
      %p41 = scmp.eq.s32.totalorder %s22, 0
      %p42 = por %p40, %p41
      %p43 = scmp.ne.s32.totalorder %s32, %s35
      %p44 = scmp.eq.s32.totalorder %s27, 1
      %p45 = por %p43, %p44
      %p46 = scmp.ne.s32.totalorder %s35, %s36
      %p47 = scmp.eq.s32.totalorder %s27, 0
      %p48 = por %p46, %p47
      %p49 = scmp.ne.s32.totalorder %s35, %s36
      %p50 = scmp.eq.s32.totalorder %s28, 1
      %p51 = por %p49, %p50
      %p53 = scmp.ne.s32.totalorder %s36, %s52
      %p54 = scmp.eq.s32.totalorder %s28, 0
      %p55 = por %p53, %p54
      %s56 = ssub.s32 %s22, %s29
      %p57 = scmp.eq.s32.totalorder %s56, 0
      %s59 = sadd.s32 %s58, 1
      %s60 = scalar_select %p57, %s58, %s59
      %p63 = pneg %p57
      %p64 = scmp.eq.s32.totalorder %s22, 1
      %p65 = por %p63, %p64
      %p66 = scmp.ne.s32.totalorder %s58, %s61
      %p67 = scmp.eq.s32.totalorder %s22, 0
      %p68 = por %p66, %p67
      %p69 = scmp.ne.s32.totalorder %s58, %s61
      %p70 = scmp.eq.s32.totalorder %s27, 1
      %p71 = por %p69, %p70
      %p72 = scmp.ne.s32.totalorder %s61, %s62
      %p73 = scmp.eq.s32.totalorder %s27, 0
      %p74 = por %p72, %p73
      %p75 = scmp.ne.s32.totalorder %s61, %s62
      %p76 = scmp.eq.s32.totalorder %s28, 1
      %p77 = por %p75, %p76
      %p79 = scmp.ne.s32.totalorder %s62, %s78
      %p80 = scmp.eq.s32.totalorder %s28, 0
      %p81 = por %p79, %p80
      %s82 = ssub.s32 %s22, %s29
      %p83 = scmp.eq.s32.totalorder %s82, 0
      %s85 = sadd.s32 %s84, 1
      %s86 = scalar_select %p83, %s84, %s85
      %p89 = pneg %p83
      %p90 = scmp.eq.s32.totalorder %s22, 1
      %p91 = por %p89, %p90
      %p92 = scmp.ne.s32.totalorder %s84, %s87
      %p93 = scmp.eq.s32.totalorder %s22, 0
      %p94 = por %p92, %p93
      %p95 = scmp.ne.s32.totalorder %s84, %s87
      %p96 = scmp.eq.s32.totalorder %s27, 1
      %p97 = por %p95, %p96
      %p98 = scmp.ne.s32.totalorder %s87, %s88
      %p99 = scmp.eq.s32.totalorder %s27, 0
      %p100 = por %p98, %p99
      %p101 = scmp.ne.s32.totalorder %s87, %s88
      %p102 = scmp.eq.s32.totalorder %s28, 1
      %p103 = por %p101, %p102
      %p105 = scmp.ne.s32.totalorder %s88, %s104
      %p106 = scmp.eq.s32.totalorder %s28, 0
      %p107 = por %p105, %p106
      %s109 = sadd.s32 %s108, 1
      %p112 = scmp.eq.s32.totalorder %s22, 1
      %p113 = scmp.ne.s32.totalorder %s108, %s110
      %p114 = scmp.eq.s32.totalorder %s22, 0
      %p115 = por %p113, %p114
      %p116 = scmp.ne.s32.totalorder %s108, %s110
      %p117 = scmp.eq.s32.totalorder %s27, 1
      %p118 = por %p116, %p117
      %p119 = scmp.ne.s32.totalorder %s110, %s111
      %p120 = scmp.eq.s32.totalorder %s27, 0
      %p121 = por %p119, %p120
      %p122 = scmp.ne.s32.totalorder %s110, %s111
      %p123 = scmp.eq.s32.totalorder %s28, 1
      %p124 = por %p122, %p123
      %p126 = scmp.ne.s32.totalorder %s111, %s125
      %p127 = scmp.eq.s32.totalorder %s28, 0
      %p128 = por %p126, %p127
      %s130 = sadd.s32 %s129, 1
      %p133 = scmp.eq.s32.totalorder %s22, 1
      %p134 = scmp.ne.s32.totalorder %s129, %s131
      %p135 = scmp.eq.s32.totalorder %s22, 0
      %p136 = por %p134, %p135
      %p137 = scmp.ne.s32.totalorder %s129, %s131
      %p138 = scmp.eq.s32.totalorder %s27, 1
      %p139 = por %p137, %p138
      %p140 = scmp.ne.s32.totalorder %s131, %s132
      %p141 = scmp.eq.s32.totalorder %s27, 0
      %p142 = por %p140, %p141
      %p143 = scmp.ne.s32.totalorder %s131, %s132
      %p144 = scmp.eq.s32.totalorder %s28, 1
      %p145 = por %p143, %p144
      %p147 = scmp.ne.s32.totalorder %s132, %s146
      %p148 = scmp.eq.s32.totalorder %s28, 0
      %p149 = por %p147, %p148
      %s151 = sadd.s32 %s150, 1
      %p154 = scmp.eq.s32.totalorder %s22, 1
      %p155 = scmp.ne.s32.totalorder %s150, %s152
      %p156 = scmp.eq.s32.totalorder %s22, 0
      %p157 = por %p155, %p156
      %p158 = scmp.ne.s32.totalorder %s150, %s152
      %p159 = scmp.eq.s32.totalorder %s27, 1
      %p160 = por %p158, %p159
      %p161 = scmp.ne.s32.totalorder %s152, %s153
      %p162 = scmp.eq.s32.totalorder %s27, 0
      %p163 = por %p161, %p162
      %p164 = scmp.ne.s32.totalorder %s152, %s153
      %p165 = scmp.eq.s32.totalorder %s28, 1
      %p166 = por %p164, %p165
      %p168 = scmp.ne.s32.totalorder %s153, %s167
      %p169 = scmp.eq.s32.totalorder %s28, 0
      %p170 = por %p168, %p169
      %s172 = sadd.s32 %s171, 1
      %p175 = scmp.eq.s32.totalorder %s22, 1
      %p176 = scmp.ne.s32.totalorder %s171, %s173
      %p177 = scmp.eq.s32.totalorder %s22, 0
      %p178 = por %p176, %p177
      %p179 = scmp.ne.s32.totalorder %s171, %s173
      %p180 = scmp.eq.s32.totalorder %s27, 1
      %p181 = por %p179, %p180
      %p182 = scmp.ne.s32.totalorder %s173, %s174
      %p183 = scmp.eq.s32.totalorder %s27, 0
      %p184 = por %p182, %p183
      %p185 = scmp.ne.s32.totalorder %s173, %s174
      %p186 = scmp.eq.s32.totalorder %s28, 1
      %p187 = por %p185, %p186
      %p189 = scmp.ne.s32.totalorder %s174, %s188
      %p190 = scmp.eq.s32.totalorder %s28, 0
      %p191 = por %p189, %p190
      %s193 = sadd.s32 %s192, 1
      %p196 = scmp.eq.s32.totalorder %s22, 1
      %p197 = scmp.ne.s32.totalorder %s192, %s194
      %p198 = scmp.eq.s32.totalorder %s22, 0
      %p199 = por %p197, %p198
      %p200 = scmp.ne.s32.totalorder %s192, %s194
      %p201 = scmp.eq.s32.totalorder %s27, 1
      %p202 = por %p200, %p201
      %p203 = scmp.ne.s32.totalorder %s194, %s195
      %p204 = scmp.eq.s32.totalorder %s27, 0
      %p205 = por %p203, %p204
      %p206 = scmp.ne.s32.totalorder %s194, %s195
      %p207 = scmp.eq.s32.totalorder %s28, 1
      %p208 = por %p206, %p207
      %p210 = scmp.ne.s32.totalorder %s195, %s209
      %p211 = scmp.eq.s32.totalorder %s28, 0
      %p212 = por %p210, %p211
      %s214 = sadd.s32 %s213, 1
      %p217 = scmp.eq.s32.totalorder %s22, 1
      %p218 = scmp.ne.s32.totalorder %s213, %s215
      %p219 = scmp.eq.s32.totalorder %s22, 0
      %p220 = por %p218, %p219
      %p221 = scmp.ne.s32.totalorder %s213, %s215
      %p222 = scmp.eq.s32.totalorder %s27, 1
      %p223 = por %p221, %p222
      %p224 = scmp.ne.s32.totalorder %s215, %s216
      %p225 = scmp.eq.s32.totalorder %s27, 0
      %p226 = por %p224, %p225
      %p227 = scmp.ne.s32.totalorder %s215, %s216
      %p228 = scmp.eq.s32.totalorder %s28, 1
      %p229 = por %p227, %p228
      %p231 = scmp.ne.s32.totalorder %s216, %s230
      %p232 = scmp.eq.s32.totalorder %s28, 0
      %p233 = por %p231, %p232
      %s235 = sadd.s32 %s234, 1
      %p238 = scmp.eq.s32.totalorder %s22, 1
      %p239 = scmp.ne.s32.totalorder %s234, %s236
      %p240 = scmp.eq.s32.totalorder %s22, 0
      %p241 = por %p239, %p240
      %p242 = scmp.ne.s32.totalorder %s234, %s236
      %p243 = scmp.eq.s32.totalorder %s27, 1
      %p244 = por %p242, %p243
      %p245 = scmp.ne.s32.totalorder %s236, %s237
      %p246 = scmp.eq.s32.totalorder %s27, 0
      %p247 = por %p245, %p246
      %p248 = scmp.ne.s32.totalorder %s236, %s237
      %p249 = scmp.eq.s32.totalorder %s28, 1
      %p250 = por %p248, %p249
      %p252 = scmp.ne.s32.totalorder %s237, %s251
      %p253 = scmp.eq.s32.totalorder %s28, 0
      %p254 = por %p252, %p253
      %s256 = sadd.s32 %s255, 1
      %p259 = scmp.eq.s32.totalorder %s22, 1
      %p260 = scmp.ne.s32.totalorder %s255, %s257
      %p261 = scmp.eq.s32.totalorder %s22, 0
      %p262 = por %p260, %p261
      %p263 = scmp.ne.s32.totalorder %s255, %s257
      %p264 = scmp.eq.s32.totalorder %s27, 1
      %p265 = por %p263, %p264
      %p266 = scmp.ne.s32.totalorder %s257, %s258
      %p267 = scmp.eq.s32.totalorder %s27, 0
      %p268 = por %p266, %p267
      %p269 = scmp.ne.s32.totalorder %s257, %s258
      %p270 = scmp.eq.s32.totalorder %s28, 1
      %p271 = por %p269, %p270
      %p273 = scmp.ne.s32.totalorder %s258, %s272
      %p274 = scmp.eq.s32.totalorder %s28, 0
      %p275 = por %p273, %p274
      %s277 = sadd.s32 %s276, 1
      %p280 = scmp.eq.s32.totalorder %s22, 1
      %p281 = scmp.ne.s32.totalorder %s276, %s278
      %p282 = scmp.eq.s32.totalorder %s22, 0
      %p283 = por %p281, %p282
      %p284 = scmp.ne.s32.totalorder %s276, %s278
      %p285 = scmp.eq.s32.totalorder %s27, 1
      %p286 = por %p284, %p285
      %p287 = scmp.ne.s32.totalorder %s278, %s279
      %p288 = scmp.eq.s32.totalorder %s27, 0
      %p289 = por %p287, %p288
      %p290 = scmp.ne.s32.totalorder %s278, %s279
      %p291 = scmp.eq.s32.totalorder %s28, 1
      %p292 = por %p290, %p291
      %p294 = scmp.ne.s32.totalorder %s279, %s293
      %p295 = scmp.eq.s32.totalorder %s28, 0
      %p296 = por %p294, %p295
      %s298 = sadd.s32 %s297, 1
      %p301 = scmp.eq.s32.totalorder %s22, 1
      %p302 = scmp.ne.s32.totalorder %s297, %s299
      %p303 = scmp.eq.s32.totalorder %s22, 0
      %p304 = por %p302, %p303
      %p305 = scmp.ne.s32.totalorder %s297, %s299
      %p306 = scmp.eq.s32.totalorder %s27, 1
      %p307 = por %p305, %p306
      %p308 = scmp.ne.s32.totalorder %s299, %s300
      %p309 = scmp.eq.s32.totalorder %s27, 0
      %p310 = por %p308, %p309
      %p311 = scmp.ne.s32.totalorder %s299, %s300
      %p312 = scmp.eq.s32.totalorder %s28, 1
      %p313 = por %p311, %p312
      %p315 = scmp.ne.s32.totalorder %s300, %s314
      %p316 = scmp.eq.s32.totalorder %s28, 0
      %p317 = por %p315, %p316
      %s318 = ssub.s32 %s22, %s29
      %p319 = scmp.eq.s32.totalorder %s318, 0
      %s321 = sadd.s32 %s320, 1
      %s322 = scalar_select %p319, %s320, %s321
      %p325 = pneg %p319
      %p326 = scmp.eq.s32.totalorder %s22, 1
      %p327 = por %p325, %p326
      %p328 = scmp.ne.s32.totalorder %s320, %s323
      %p329 = scmp.eq.s32.totalorder %s22, 0
      %p330 = por %p328, %p329
      %p331 = scmp.ne.s32.totalorder %s320, %s323
      %p332 = scmp.eq.s32.totalorder %s27, 1
      %p333 = por %p331, %p332
      %p334 = scmp.ne.s32.totalorder %s323, %s324
      %p335 = scmp.eq.s32.totalorder %s27, 0
      %p336 = por %p334, %p335
      %p337 = scmp.ne.s32.totalorder %s323, %s324
      %p338 = scmp.eq.s32.totalorder %s28, 1
      %p339 = por %p337, %p338
      %p341 = scmp.ne.s32.totalorder %s324, %s340
      %p342 = scmp.eq.s32.totalorder %s28, 0
      %p343 = por %p341, %p342
      %p344 = scmp.le.s32.totalorder 1, %s22
      %p345 = scmp.lt.s32.totalorder %s22, 3
      %p346 = pnand %p344, %p345
      %p347 = pneg %p346
      // Predicated region
      $region9: #{tpu_custom_call.1} parent=5 // pred_check
        _
      $region10: #{tpu_custom_call.1} parent=5 // pred_check_branch
        %349 = sbr.rel (%p346) target = $region12
      $region11: #{tpu_custom_call.1} parent=5 // pred_region
        %s350 = ssub.s32 %s22, 1
        // Predicated region
        $region13: #{tpu_custom_call.1} parent=11 // pred_check
          %p351 = pneg %p121
        $region14: #{tpu_custom_call.1} parent=11 // pred_check_branch
          %353 = sbr.rel (%p351) target = $region16
        $region15: #{tpu_custom_call.1} parent=11 // pred_region
          _
        $region16: #{tpu_custom_call.1} parent=11 // pred_fallthru
          _
        // Predicated region
        $region17: #{tpu_custom_call.1} parent=11 // pred_check
          %p354 = pneg %p142
        $region18: #{tpu_custom_call.1} parent=11 // pred_check_branch
          %356 = sbr.rel (%p354) target = $region20
        $region19: #{tpu_custom_call.1} parent=11 // pred_region
          _
        $region20: #{tpu_custom_call.1} parent=11 // pred_fallthru
          _
        // Predicated region
        $region21: #{tpu_custom_call.1} parent=11 // pred_check
          %p357 = pneg %p163
        $region22: #{tpu_custom_call.1} parent=11 // pred_check_branch
          %359 = sbr.rel (%p357) target = $region24
        $region23: #{tpu_custom_call.1} parent=11 // pred_region
          _
        $region24: #{tpu_custom_call.1} parent=11 // pred_fallthru
          _
        // Predicated region
        $region25: #{tpu_custom_call.1} parent=11 // pred_check
          %p360 = pneg %p184
        $region26: #{tpu_custom_call.1} parent=11 // pred_check_branch
          %362 = sbr.rel (%p360) target = $region28
        $region27: #{tpu_custom_call.1} parent=11 // pred_region
          _
        $region28: #{tpu_custom_call.1} parent=11 // pred_fallthru
          _
        // Predicated region
        $region29: #{tpu_custom_call.1} parent=11 // pred_check
          %p363 = pneg %p205
        $region30: #{tpu_custom_call.1} parent=11 // pred_check_branch
          %365 = sbr.rel (%p363) target = $region32
        $region31: #{tpu_custom_call.1} parent=11 // pred_region
          _
        $region32: #{tpu_custom_call.1} parent=11 // pred_fallthru
          _
        // Predicated region
        $region33: #{tpu_custom_call.1} parent=11 // pred_check
          %p366 = pneg %p226
        $region34: #{tpu_custom_call.1} parent=11 // pred_check_branch
          %368 = sbr.rel (%p366) target = $region36
        $region35: #{tpu_custom_call.1} parent=11 // pred_region
          _
        $region36: #{tpu_custom_call.1} parent=11 // pred_fallthru
          _
        // Predicated region
        $region37: #{tpu_custom_call.1} parent=11 // pred_check
          %p369 = pneg %p247
        $region38: #{tpu_custom_call.1} parent=11 // pred_check_branch
          %371 = sbr.rel (%p369) target = $region40
        $region39: #{tpu_custom_call.1} parent=11 // pred_region
          _
        $region40: #{tpu_custom_call.1} parent=11 // pred_fallthru
          _
        // Predicated region
        $region41: #{tpu_custom_call.1} parent=11 // pred_check
          %p372 = pneg %p268
        $region42: #{tpu_custom_call.1} parent=11 // pred_check_branch
          %374 = sbr.rel (%p372) target = $region44
        $region43: #{tpu_custom_call.1} parent=11 // pred_region
          _
        $region44: #{tpu_custom_call.1} parent=11 // pred_fallthru
          _
        // Predicated region
        $region45: #{tpu_custom_call.1} parent=11 // pred_check
          %p375 = pneg %p289
        $region46: #{tpu_custom_call.1} parent=11 // pred_check_branch
          %377 = sbr.rel (%p375) target = $region48
        $region47: #{tpu_custom_call.1} parent=11 // pred_region
          _
        $region48: #{tpu_custom_call.1} parent=11 // pred_fallthru
          _
        // Predicated region
        $region49: #{tpu_custom_call.1} parent=11 // pred_check
          %p378 = pneg %p310
        $region50: #{tpu_custom_call.1} parent=11 // pred_check_branch
          %380 = sbr.rel (%p378) target = $region52
        $region51: #{tpu_custom_call.1} parent=11 // pred_region
          _
        $region52: #{tpu_custom_call.1} parent=11 // pred_fallthru
          _
      $region12: #{tpu_custom_call.1} parent=5 // pred_fallthru
        _
      %p381 = scmp.lt.s32.totalorder %s22, 2
      // Predicated region
      $region53: #{tpu_custom_call.1} parent=5 // pred_check
        %p382 = pneg %p381
      $region54: #{tpu_custom_call.1} parent=5 // pred_check_branch
        %384 = sbr.rel (%p382) target = $region56
      $region55: #{tpu_custom_call.1} parent=5 // pred_region
        // Predicated region
        $region57: #{tpu_custom_call.1} parent=55 // pred_check
          %p385 = pneg %p42
        $region58: #{tpu_custom_call.1} parent=55 // pred_check_branch
          %387 = sbr.rel (%p385) target = $region60
        $region59: #{tpu_custom_call.1} parent=55 // pred_region
          %p388 = scmp.lt.s32.totalorder %s22, 1
          %s389 = scalar_select %p388, %s22, 1
          %s390 = smul.addr %s389, 8
          %s391 = scalar_lea.vmem %s0, %s390
        $region60: #{tpu_custom_call.1} parent=55 // pred_fallthru
          _
        // Predicated region
        $region61: #{tpu_custom_call.1} parent=55 // pred_check
          %p392 = pneg %p68
        $region62: #{tpu_custom_call.1} parent=55 // pred_check_branch
          %394 = sbr.rel (%p392) target = $region64
        $region63: #{tpu_custom_call.1} parent=55 // pred_region
          %p395 = scmp.lt.s32.totalorder %s22, 1
          %s396 = scalar_select %p395, %s22, 1
          %s397 = smul.addr %s396, 8
          %s398 = scalar_lea.vmem %s1, %s397
        $region64: #{tpu_custom_call.1} parent=55 // pred_fallthru
          _
        // Predicated region
        $region65: #{tpu_custom_call.1} parent=55 // pred_check
          %p399 = pneg %p94
        $region66: #{tpu_custom_call.1} parent=55 // pred_check_branch
          %401 = sbr.rel (%p399) target = $region68
        $region67: #{tpu_custom_call.1} parent=55 // pred_region
          %p402 = scmp.lt.s32.totalorder %s22, 1
          %s403 = scalar_select %p402, %s22, 1
          %s404 = smul.addr %s403, 8
          %s405 = scalar_lea.vmem %s2, %s404
        $region68: #{tpu_custom_call.1} parent=55 // pred_fallthru
          _
      $region56: #{tpu_custom_call.1} parent=5 // pred_fallthru
        _
      %p406 = scmp.le.s32.totalorder 1, %s22
      %p407 = scmp.lt.s32.totalorder %s22, 3
      %p408 = pnand %p406, %p407
      %p409 = pneg %p408
      // Predicated region
      $region69: #{tpu_custom_call.1} parent=5 // pred_check
        _
      $region70: #{tpu_custom_call.1} parent=5 // pred_check_branch
        %411 = sbr.rel (%p408) target = $region72
      $region71: #{tpu_custom_call.1} parent=5 // pred_region
        %s412 = ssub.s32 %s22, 1
        %p413 = scmp.lt.s32.totalorder %s27, 1
        %s414 = scalar_select %p413, %s27, 1
        %s415 = smul.addr %s414, 8
        %s416 = scalar_lea.vmem %s0, %s415
        %p417 = pneg %p48
        %p418 = pneg %p45
        %p419 = scmp.lt.s32.totalorder %s27, 1
        %s420 = scalar_select %p419, %s27, 1
        %s421 = smul.addr %s420, 8
        %s422 = scalar_lea.vmem %s1, %s421
        %p423 = pneg %p74
        %p424 = pneg %p71
        %p425 = scmp.lt.s32.totalorder %s27, 1
        %s426 = scalar_select %p425, %s27, 1
        %s427 = smul.addr %s426, 8
        %s428 = scalar_lea.vmem %s2, %s427
        %p429 = pneg %p100
        %p430 = pneg %p97
        %p431 = pneg %p121
        %p432 = pneg %p118
        %p433 = pneg %p142
        %p434 = pneg %p139
        %p435 = pneg %p163
        %p436 = pneg %p160
        %p437 = pneg %p184
        %p438 = pneg %p181
        %p439 = pneg %p205
        %p440 = pneg %p202
        %p441 = pneg %p226
        %p442 = pneg %p223
        %p443 = pneg %p247
        %p444 = pneg %p244
        %p445 = pneg %p268
        %p446 = pneg %p265
        %p447 = pneg %p289
        %p448 = pneg %p286
        %p449 = pneg %p310
        %p450 = pneg %p307
        %p451 = pneg %p336
        %p452 = pneg %p333
        %s453 = sand.u32 %s323, 1
        %s454 = scalar_lea.sflag [#allocation3], %s453
        %s455 = sand.u32 %s323, 1
        %s456 = smul.addr %s455, 8
        %s457 = scalar_lea.vmem [#allocation2], %s456
        %p458 = scmp.lt.s32.totalorder %s27, 1
        %s459 = scalar_select %p458, %s27, 1
        %s460 = smul.addr %s459, 8
        %s461 = scalar_lea.vmem %s0, %s460
        %p462 = scmp.lt.s32.totalorder %s27, 1
        %s463 = scalar_select %p462, %s27, 1
        %s464 = smul.addr %s463, 8
        %s465 = scalar_lea.vmem %s1, %s464
        %p466 = scmp.lt.s32.totalorder %s27, 1
        %s467 = scalar_select %p466, %s27, 1
        %s468 = smul.addr %s467, 8
        %s469 = scalar_lea.vmem %s2, %s468
        %v470 = vld [vmem:[%s461] sm:$0xff]
        %v471 = vld [vmem:[%s3] sm:$0xff]
        %v472 = vld [vmem:[%s3 + $0x8] sm:$0xff]
        %v473 = vld [vmem:[%s3 + $0x10] sm:$0xff]
        %v474 = vld [vmem:[%s3 + $0x18] sm:$0xff]
        %v475 = vld [vmem:[%s465] sm:$0xff]
        %v476 = vld [vmem:[%s4] sm:$0xff]
        %vm477 = vcmask 64512
        %v479 = vsel %vm477, %v475, 0
        %481 = vmatprep.subr.mxu0 0.0
        %482 = vmatpush1.msra.mxu0 0.0
        %483 = vmatprep.subr.mxu0 0.0
        %484 = vmatpush1.msra.mxu0 0.0
        %485 = vmatprep.subr.mxu0 0.0
        %486 = vmatpush1.msra.mxu0 0.0
        %487 = vmatprep.subr.mxu0 0.0
        %488 = vmatpush1.msra.mxu0 0.0
        %489 = vmatprep.subr.mxu0 0.0
        %490 = vmatpush1.msra.mxu0 0.0
        %491 = vmatprep.subr.mxu0 0.0
        %492 = vmatpush1.msra.mxu0 0.0
        %493 = vmatprep.subr.mxu0 0.0
        %494 = vmatpush1.msra.mxu0 0.0
        %495 = vmatprep.subr.mxu0 0.0
        %496 = vmatpush1.msra.mxu0 0.0
        %497 = vmatprep.subr.mxu0 0.0
        %498 = vmatpush1.msra.mxu0 0.0
        %499 = vmatprep.subr.mxu0 0.0
        %500 = vmatpush1.msra.mxu0 0.0
        %501 = vmatprep.subr.mxu0 0.0
        %502 = vmatpush1.msra.mxu0 0.0
        %503 = vmatprep.subr.mxu0 0.0
        %504 = vmatpush1.msra.mxu0 0.0
        %505 = vmatprep.subr.mxu0 0.0
        %506 = vmatpush1.msra.mxu0 0.0
        %507 = vmatprep.subr.mxu0 0.0
        %508 = vmatpush1.msra.mxu0 0.0
        %509 = vmatprep.subr.mxu0 0.0
        %510 = vmatpush1.msra.mxu0 0.0
        %511 = vmatprep.subr.mxu0 0.0
        %512 = vmatpush1.msra.mxu0 %v476
        %513 = vmatprep.subr.mxu0 0.0
        %514 = vmatpush2.msra.mxu0 0.0
        %515 = vmatprep.subr.mxu0 0.0
        %516 = vmatpush2.msra.mxu0 0.0
        %517 = vmatprep.subr.mxu0 0.0
        %518 = vmatpush2.msra.mxu0 0.0
        %519 = vmatprep.subr.mxu0 0.0
        %520 = vmatpush2.msra.mxu0 0.0
        %521 = vmatprep.subr.mxu0 0.0
        %522 = vmatpush2.msra.mxu0 0.0
        %523 = vmatprep.subr.mxu0 0.0
        %524 = vmatpush2.msra.mxu0 0.0
        %525 = vmatprep.subr.mxu0 0.0
        %526 = vmatpush2.msra.mxu0 0.0
        %527 = vmatprep.subr.mxu0 0.0
        %528 = vmatpush2.msra.mxu0 0.0
        %529 = vmatprep.subr.mxu0 0.0
        %530 = vmatpush2.msra.mxu0 0.0
        %531 = vmatprep.subr.mxu0 0.0
        %532 = vmatpush2.msra.mxu0 0.0
        %533 = vmatprep.subr.mxu0 0.0
        %534 = vmatpush2.msra.mxu0 0.0
        %535 = vmatprep.subr.mxu0 0.0
        %536 = vmatpush2.msra.mxu0 0.0
        %537 = vmatprep.subr.mxu0 0.0
        %538 = vmatpush2.msra.mxu0 0.0
        %539 = vmatprep.subr.mxu0 0.0
        %540 = vmatpush2.msra.mxu0 0.0
        %541 = vmatprep.subr.mxu0 0.0
        %542 = vmatpush2.msra.mxu0 0.0
        %543 = vmatprep.subr.mxu0 0.0
        %544 = vmatpush2.msra.mxu0 0.0
        %545 = vmatprep.mubr.f32.mxu0 0.0
        %546 = vmatmul.mubr.f32.gmra.mxu0 %v479
        %v547 = vpop.f32.mrf.mxu0
        %v548 = vadd.f32 0.0, %v547
        %v549 = vpop.f32.mrf.mxu0
        %550 = vdwg.mxu0
        %vm551 = vcmask 261120
        %v553 = vsel %vm551, %v470, 0
        %555 = vmatprep.subr.mxu0 0.0
        %556 = vmatpush1.msra.mxu0 0.0
        %557 = vmatprep.subr.mxu0 0.0
        %558 = vmatpush1.msra.mxu0 0.0
        %559 = vmatprep.subr.mxu0 0.0
        %560 = vmatpush1.msra.mxu0 0.0
        %561 = vmatprep.subr.mxu0 0.0
        %562 = vmatpush1.msra.mxu0 0.0
        %563 = vmatprep.subr.mxu0 0.0
        %564 = vmatpush1.msra.mxu0 0.0
        %565 = vmatprep.subr.mxu0 0.0
        %566 = vmatpush1.msra.mxu0 0.0
        %567 = vmatprep.subr.mxu0 0.0
        %568 = vmatpush1.msra.mxu0 0.0
        %569 = vmatprep.subr.mxu0 0.0
        %570 = vmatpush1.msra.mxu0 0.0
        %571 = vmatprep.subr.mxu0 0.0
        %572 = vmatpush1.msra.mxu0 0.0
        %573 = vmatprep.subr.mxu0 0.0
        %574 = vmatpush1.msra.mxu0 0.0
        %575 = vmatprep.subr.mxu0 0.0
        %576 = vmatpush1.msra.mxu0 0.0
        %577 = vmatprep.subr.mxu0 0.0
        %578 = vmatpush1.msra.mxu0 0.0
        %579 = vmatprep.subr.mxu0 0.0
        %580 = vmatpush1.msra.mxu0 %v474
        %581 = vmatprep.subr.mxu0 0.0
        %582 = vmatpush1.msra.mxu0 %v473
        %583 = vmatprep.subr.mxu0 0.0
        %584 = vmatpush1.msra.mxu0 %v472
        %585 = vmatprep.subr.mxu0 0.0
        %586 = vmatpush1.msra.mxu0 %v471
        %587 = vmatprep.subr.mxu0 0.0
        %588 = vmatpush2.msra.mxu0 0.0
        %589 = vmatprep.subr.mxu0 0.0
        %590 = vmatpush2.msra.mxu0 0.0
        %591 = vmatprep.subr.mxu0 0.0
        %592 = vmatpush2.msra.mxu0 0.0
        %593 = vmatprep.subr.mxu0 0.0
        %594 = vmatpush2.msra.mxu0 0.0
        %595 = vmatprep.subr.mxu0 0.0
        %596 = vmatpush2.msra.mxu0 0.0
        %597 = vmatprep.subr.mxu0 0.0
        %598 = vmatpush2.msra.mxu0 0.0
        %599 = vmatprep.subr.mxu0 0.0
        %600 = vmatpush2.msra.mxu0 0.0
        %601 = vmatprep.subr.mxu0 0.0
        %602 = vmatpush2.msra.mxu0 0.0
        %603 = vmatprep.subr.mxu0 0.0
        %604 = vmatpush2.msra.mxu0 0.0
        %605 = vmatprep.subr.mxu0 0.0
        %606 = vmatpush2.msra.mxu0 0.0
        %607 = vmatprep.subr.mxu0 0.0
        %608 = vmatpush2.msra.mxu0 0.0
        %609 = vmatprep.subr.mxu0 0.0
        %610 = vmatpush2.msra.mxu0 0.0
        %611 = vmatprep.subr.mxu0 0.0
        %612 = vmatpush2.msra.mxu0 0.0
        %613 = vmatprep.subr.mxu0 0.0
        %614 = vmatpush2.msra.mxu0 0.0
        %615 = vmatprep.subr.mxu0 0.0
        %616 = vmatpush2.msra.mxu0 0.0
        %617 = vmatprep.subr.mxu0 0.0
        %618 = vmatpush2.msra.mxu0 0.0
        %619 = vmatprep.mubr.f32.mxu0 0.0
        %620 = vmatmul.mubr.f32.gmra.mxu0 %v553
        %v621 = vpop.f32.mrf.mxu0
        %v622 = vadd.f32 %v548, %v621
        %v623 = vpop.f32.mrf.mxu0
        %624 = vdwg.mxu0
        %v625 = vld [vmem:[%s5] sm:$0x1]
        %v627 = vlaneseq
        %v628 = vshrl.u32 %v627, 7
        %v629 = vsub.s32 0, %v628
        %v630 = vrot.slane %v625, %v629
        %v632 = vadd.f32 %v622, %v630
        %v633 = vmax.f32 %v632, 0.0
        %v634 = vld [vmem:[%s6] sm:$0xff]
        %v635 = vld [vmem:[%s6 + $0x8] sm:$0xff]
        %v636 = vld [vmem:[%s6 + $0x10] sm:$0xff]
        %v637 = vld [vmem:[%s6 + $0x18] sm:$0xff]
        %v638 = vld [vmem:[%s6 + $0x20] sm:$0xff]
        %v639 = vld [vmem:[%s6 + $0x28] sm:$0xff]
        %v640 = vld [vmem:[%s6 + $0x30] sm:$0xff]
        %v641 = vld [vmem:[%s6 + $0x38] sm:$0xff]
        %v642 = vld [vmem:[%s6 + $0x40] sm:$0xff]
        %v643 = vld [vmem:[%s6 + $0x48] sm:$0xff]
        %v644 = vld [vmem:[%s6 + $0x50] sm:$0xff]
        %v645 = vld [vmem:[%s6 + $0x58] sm:$0xff]
        %v646 = vld [vmem:[%s6 + $0x60] sm:$0xff]
        %v647 = vld [vmem:[%s6 + $0x68] sm:$0xff]
        %v648 = vld [vmem:[%s6 + $0x70] sm:$0xff]
        %v649 = vld [vmem:[%s6 + $0x78] sm:$0xff]
        %v650 = vld [vmem:[%s7] sm:$0x1]
        %v652 = vlaneseq
        %v653 = vshrl.u32 %v652, 7
        %v654 = vsub.s32 0, %v653
        %v655 = vrot.slane %v650, %v654
        %657 = vmatprep.subr.mxu0 0.0
        %658 = vmatpush1.msra.mxu0 %v649
        %659 = vmatprep.subr.mxu0 0.0
        %660 = vmatpush1.msra.mxu0 %v648
        %661 = vmatprep.subr.mxu0 0.0
        %662 = vmatpush1.msra.mxu0 %v647
        %663 = vmatprep.subr.mxu0 0.0
        %664 = vmatpush1.msra.mxu0 %v646
        %665 = vmatprep.subr.mxu0 0.0
        %666 = vmatpush1.msra.mxu0 %v645
        %667 = vmatprep.subr.mxu0 0.0
        %668 = vmatpush1.msra.mxu0 %v644
        %669 = vmatprep.subr.mxu0 0.0
        %670 = vmatpush1.msra.mxu0 %v643
        %671 = vmatprep.subr.mxu0 0.0
        %672 = vmatpush1.msra.mxu0 %v642
        %673 = vmatprep.subr.mxu0 0.0
        %674 = vmatpush1.msra.mxu0 %v641
        %675 = vmatprep.subr.mxu0 0.0
        %676 = vmatpush1.msra.mxu0 %v640
        %677 = vmatprep.subr.mxu0 0.0
        %678 = vmatpush1.msra.mxu0 %v639
        %679 = vmatprep.subr.mxu0 0.0
        %680 = vmatpush1.msra.mxu0 %v638
        %681 = vmatprep.subr.mxu0 0.0
        %682 = vmatpush1.msra.mxu0 %v637
        %683 = vmatprep.subr.mxu0 0.0
        %684 = vmatpush1.msra.mxu0 %v636
        %685 = vmatprep.subr.mxu0 0.0
        %686 = vmatpush1.msra.mxu0 %v635
        %687 = vmatprep.subr.mxu0 0.0
        %688 = vmatpush1.msra.mxu0 %v634
        %689 = vmatprep.subr.mxu0 0.0
        %690 = vmatpush2.msra.mxu0 0.0
        %691 = vmatprep.subr.mxu0 0.0
        %692 = vmatpush2.msra.mxu0 0.0
        %693 = vmatprep.subr.mxu0 0.0
        %694 = vmatpush2.msra.mxu0 0.0
        %695 = vmatprep.subr.mxu0 0.0
        %696 = vmatpush2.msra.mxu0 0.0
        %697 = vmatprep.subr.mxu0 0.0
        %698 = vmatpush2.msra.mxu0 0.0
        %699 = vmatprep.subr.mxu0 0.0
        %700 = vmatpush2.msra.mxu0 0.0
        %701 = vmatprep.subr.mxu0 0.0
        %702 = vmatpush2.msra.mxu0 0.0
        %703 = vmatprep.subr.mxu0 0.0
        %704 = vmatpush2.msra.mxu0 0.0
        %705 = vmatprep.subr.mxu0 0.0
        %706 = vmatpush2.msra.mxu0 0.0
        %707 = vmatprep.subr.mxu0 0.0
        %708 = vmatpush2.msra.mxu0 0.0
        %709 = vmatprep.subr.mxu0 0.0
        %710 = vmatpush2.msra.mxu0 0.0
        %711 = vmatprep.subr.mxu0 0.0
        %712 = vmatpush2.msra.mxu0 0.0
        %713 = vmatprep.subr.mxu0 0.0
        %714 = vmatpush2.msra.mxu0 0.0
        %715 = vmatprep.subr.mxu0 0.0
        %716 = vmatpush2.msra.mxu0 0.0
        %717 = vmatprep.subr.mxu0 0.0
        %718 = vmatpush2.msra.mxu0 0.0
        %719 = vmatprep.subr.mxu0 0.0
        %720 = vmatpush2.msra.mxu0 0.0
        %721 = vmatprep.mubr.f32.mxu0 0.0
        %722 = vmatmul.mubr.f32.gmra.mxu0 %v633
        %v723 = vpop.f32.mrf.mxu0
        %v724 = vadd.f32 %v655, %v723
        %v725 = vpop.f32.mrf.mxu0
        %726 = vdwg.mxu0
        %v727 = vlaneseq
        %v728 = vand.u32 %v727, 127
        %vm729 = vcmp.lt.s32.totalorder %v728, 32
        %v730 = vmax.f32 %v724, 0.0
        %v731 = vand.u32 2147483647, %v724
        %v732 = vsub.f32 0.0, %v731
        %v733 = vmul.f32 %v732, 1.442695
        %v734 = vpow.pop %v733
        %v735 = vadd.f32 %v734, 1.0
        %v736 = vlog2.pop %v735
        %v737 = vmul.f32 %v736, 0.6931472
        %v738 = vmul.f32 -0.5, %v734
        %v739 = vadd.f32 %v738, 1.0
        %v740 = vmul.f32 %v739, %v734
        %v741 = vand.u32 2147483647, %v734
        %vm742 = vcmp.lt.f32.partialorder %v741, 0.0004427343
        %v743 = vsel %vm742, %v740, %v737
        %v744 = vadd.f32 %v730, %v743
        %v745 = vsel %vm729, %v724, %v744
        %v746 = vld [vmem:[%s8] sm:$0xff]
        %v747 = vld [vmem:[%s8 + $0x8] sm:$0xff]
        %v748 = vld [vmem:[%s8 + $0x10] sm:$0xff]
        %v749 = vld [vmem:[%s8 + $0x18] sm:$0xff]
        %v750 = vld [vmem:[%s8 + $0x20] sm:$0xff]
        %v751 = vld [vmem:[%s8 + $0x28] sm:$0xff]
        %v752 = vld [vmem:[%s8 + $0x30] sm:$0xff]
        %v753 = vld [vmem:[%s8 + $0x38] sm:$0xff]
        %v754 = vld [vmem:[%s469] sm:$0xff]
        %v755 = vld [vmem:[%s9] sm:$0xff]
        %v756 = vld [vmem:[%s9 + $0x8] sm:$0xff]
        %v757 = vld [vmem:[%s9 + $0x10] sm:$0xff]
        %v758 = vld [vmem:[%s9 + $0x18] sm:$0xff]
        %v760 = vsel %vm551, %v754, 0
        %762 = vmatprep.subr.mxu0 0.0
        %763 = vmatpush1.msra.mxu0 0.0
        %764 = vmatprep.subr.mxu0 0.0
        %765 = vmatpush1.msra.mxu0 0.0
        %766 = vmatprep.subr.mxu0 0.0
        %767 = vmatpush1.msra.mxu0 0.0
        %768 = vmatprep.subr.mxu0 0.0
        %769 = vmatpush1.msra.mxu0 0.0
        %770 = vmatprep.subr.mxu0 0.0
        %771 = vmatpush1.msra.mxu0 0.0
        %772 = vmatprep.subr.mxu0 0.0
        %773 = vmatpush1.msra.mxu0 0.0
        %774 = vmatprep.subr.mxu0 0.0
        %775 = vmatpush1.msra.mxu0 0.0
        %776 = vmatprep.subr.mxu0 0.0
        %777 = vmatpush1.msra.mxu0 0.0
        %778 = vmatprep.subr.mxu0 0.0
        %779 = vmatpush1.msra.mxu0 0.0
        %780 = vmatprep.subr.mxu0 0.0
        %781 = vmatpush1.msra.mxu0 0.0
        %782 = vmatprep.subr.mxu0 0.0
        %783 = vmatpush1.msra.mxu0 0.0
        %784 = vmatprep.subr.mxu0 0.0
        %785 = vmatpush1.msra.mxu0 0.0
        %786 = vmatprep.subr.mxu0 0.0
        %787 = vmatpush1.msra.mxu0 %v758
        %788 = vmatprep.subr.mxu0 0.0
        %789 = vmatpush1.msra.mxu0 %v757
        %790 = vmatprep.subr.mxu0 0.0
        %791 = vmatpush1.msra.mxu0 %v756
        %792 = vmatprep.subr.mxu0 0.0
        %793 = vmatpush1.msra.mxu0 %v755
        %794 = vmatprep.subr.mxu0 0.0
        %795 = vmatpush2.msra.mxu0 0.0
        %796 = vmatprep.subr.mxu0 0.0
        %797 = vmatpush2.msra.mxu0 0.0
        %798 = vmatprep.subr.mxu0 0.0
        %799 = vmatpush2.msra.mxu0 0.0
        %800 = vmatprep.subr.mxu0 0.0
        %801 = vmatpush2.msra.mxu0 0.0
        %802 = vmatprep.subr.mxu0 0.0
        %803 = vmatpush2.msra.mxu0 0.0
        %804 = vmatprep.subr.mxu0 0.0
        %805 = vmatpush2.msra.mxu0 0.0
        %806 = vmatprep.subr.mxu0 0.0
        %807 = vmatpush2.msra.mxu0 0.0
        %808 = vmatprep.subr.mxu0 0.0
        %809 = vmatpush2.msra.mxu0 0.0
        %810 = vmatprep.subr.mxu0 0.0
        %811 = vmatpush2.msra.mxu0 0.0
        %812 = vmatprep.subr.mxu0 0.0
        %813 = vmatpush2.msra.mxu0 0.0
        %814 = vmatprep.subr.mxu0 0.0
        %815 = vmatpush2.msra.mxu0 0.0
        %816 = vmatprep.subr.mxu0 0.0
        %817 = vmatpush2.msra.mxu0 0.0
        %818 = vmatprep.subr.mxu0 0.0
        %819 = vmatpush2.msra.mxu0 0.0
        %820 = vmatprep.subr.mxu0 0.0
        %821 = vmatpush2.msra.mxu0 0.0
        %822 = vmatprep.subr.mxu0 0.0
        %823 = vmatpush2.msra.mxu0 0.0
        %824 = vmatprep.subr.mxu0 0.0
        %825 = vmatpush2.msra.mxu0 0.0
        %826 = vmatprep.mubr.f32.mxu0 0.0
        %827 = vmatmul.mubr.f32.gmra.mxu0 %v760
        %v828 = vpop.f32.mrf.mxu0
        %v829 = vadd.f32 0.0, %v828
        %v830 = vpop.f32.mrf.mxu0
        %831 = vdwg.mxu0
        %vm832 = vcmask 523264
        %v834 = vsel %vm832, %v745, 0
        %836 = vmatprep.subr.mxu0 0.0
        %837 = vmatpush1.msra.mxu0 0.0
        %838 = vmatprep.subr.mxu0 0.0
        %839 = vmatpush1.msra.mxu0 0.0
        %840 = vmatprep.subr.mxu0 0.0
        %841 = vmatpush1.msra.mxu0 0.0
        %842 = vmatprep.subr.mxu0 0.0
        %843 = vmatpush1.msra.mxu0 0.0
        %844 = vmatprep.subr.mxu0 0.0
        %845 = vmatpush1.msra.mxu0 0.0
        %846 = vmatprep.subr.mxu0 0.0
        %847 = vmatpush1.msra.mxu0 0.0
        %848 = vmatprep.subr.mxu0 0.0
        %849 = vmatpush1.msra.mxu0 0.0
        %850 = vmatprep.subr.mxu0 0.0
        %851 = vmatpush1.msra.mxu0 0.0
        %852 = vmatprep.subr.mxu0 0.0
        %853 = vmatpush1.msra.mxu0 %v753
        %854 = vmatprep.subr.mxu0 0.0
        %855 = vmatpush1.msra.mxu0 %v752
        %856 = vmatprep.subr.mxu0 0.0
        %857 = vmatpush1.msra.mxu0 %v751
        %858 = vmatprep.subr.mxu0 0.0
        %859 = vmatpush1.msra.mxu0 %v750
        %860 = vmatprep.subr.mxu0 0.0
        %861 = vmatpush1.msra.mxu0 %v749
        %862 = vmatprep.subr.mxu0 0.0
        %863 = vmatpush1.msra.mxu0 %v748
        %864 = vmatprep.subr.mxu0 0.0
        %865 = vmatpush1.msra.mxu0 %v747
        %866 = vmatprep.subr.mxu0 0.0
        %867 = vmatpush1.msra.mxu0 %v746
        %868 = vmatprep.subr.mxu0 0.0
        %869 = vmatpush2.msra.mxu0 0.0
        %870 = vmatprep.subr.mxu0 0.0
        %871 = vmatpush2.msra.mxu0 0.0
        %872 = vmatprep.subr.mxu0 0.0
        %873 = vmatpush2.msra.mxu0 0.0
        %874 = vmatprep.subr.mxu0 0.0
        %875 = vmatpush2.msra.mxu0 0.0
        %876 = vmatprep.subr.mxu0 0.0
        %877 = vmatpush2.msra.mxu0 0.0
        %878 = vmatprep.subr.mxu0 0.0
        %879 = vmatpush2.msra.mxu0 0.0
        %880 = vmatprep.subr.mxu0 0.0
        %881 = vmatpush2.msra.mxu0 0.0
        %882 = vmatprep.subr.mxu0 0.0
        %883 = vmatpush2.msra.mxu0 0.0
        %884 = vmatprep.subr.mxu0 0.0
        %885 = vmatpush2.msra.mxu0 0.0
        %886 = vmatprep.subr.mxu0 0.0
        %887 = vmatpush2.msra.mxu0 0.0
        %888 = vmatprep.subr.mxu0 0.0
        %889 = vmatpush2.msra.mxu0 0.0
        %890 = vmatprep.subr.mxu0 0.0
        %891 = vmatpush2.msra.mxu0 0.0
        %892 = vmatprep.subr.mxu0 0.0
        %893 = vmatpush2.msra.mxu0 0.0
        %894 = vmatprep.subr.mxu0 0.0
        %895 = vmatpush2.msra.mxu0 0.0
        %896 = vmatprep.subr.mxu0 0.0
        %897 = vmatpush2.msra.mxu0 0.0
        %898 = vmatprep.subr.mxu0 0.0
        %899 = vmatpush2.msra.mxu0 0.0
        %900 = vmatprep.mubr.f32.mxu0 0.0
        %901 = vmatmul.mubr.f32.gmra.mxu0 %v834
        %v902 = vpop.f32.mrf.mxu0
        %v903 = vadd.f32 %v829, %v902
        %v904 = vpop.f32.mrf.mxu0
        %905 = vdwg.mxu0
        %v906 = vld [vmem:[%s10] sm:$0x1]
        %v908 = vlaneseq
        %v909 = vshrl.u32 %v908, 7
        %v910 = vsub.s32 0, %v909
        %v911 = vrot.slane %v906, %v910
        %v913 = vadd.f32 %v903, %v911
        %v914 = vmax.f32 %v913, 0.0
        %v915 = vld [vmem:[%s11] sm:$0xff]
        %v916 = vld [vmem:[%s11 + $0x8] sm:$0xff]
        %v917 = vld [vmem:[%s11 + $0x10] sm:$0xff]
        %v918 = vld [vmem:[%s11 + $0x18] sm:$0xff]
        %v919 = vld [vmem:[%s11 + $0x20] sm:$0xff]
        %v920 = vld [vmem:[%s11 + $0x28] sm:$0xff]
        %v921 = vld [vmem:[%s11 + $0x30] sm:$0xff]
        %v922 = vld [vmem:[%s11 + $0x38] sm:$0xff]
        %v923 = vld [vmem:[%s11 + $0x40] sm:$0xff]
        %v924 = vld [vmem:[%s11 + $0x48] sm:$0xff]
        %v925 = vld [vmem:[%s11 + $0x50] sm:$0xff]
        %v926 = vld [vmem:[%s11 + $0x58] sm:$0xff]
        %v927 = vld [vmem:[%s11 + $0x60] sm:$0xff]
        %v928 = vld [vmem:[%s11 + $0x68] sm:$0xff]
        %v929 = vld [vmem:[%s11 + $0x70] sm:$0xff]
        %v930 = vld [vmem:[%s11 + $0x78] sm:$0xff]
        %v931 = vld [vmem:[%s12] sm:$0x1]
        %v933 = vlaneseq
        %v934 = vshrl.u32 %v933, 7
        %v935 = vsub.s32 0, %v934
        %v936 = vrot.slane %v931, %v935
        %938 = vmatprep.subr.mxu0 0.0
        %939 = vmatpush1.msra.mxu0 %v930
        %940 = vmatprep.subr.mxu0 0.0
        %941 = vmatpush1.msra.mxu0 %v929
        %942 = vmatprep.subr.mxu0 0.0
        %943 = vmatpush1.msra.mxu0 %v928
        %944 = vmatprep.subr.mxu0 0.0
        %945 = vmatpush1.msra.mxu0 %v927
        %946 = vmatprep.subr.mxu0 0.0
        %947 = vmatpush1.msra.mxu0 %v926
        %948 = vmatprep.subr.mxu0 0.0
        %949 = vmatpush1.msra.mxu0 %v925
        %950 = vmatprep.subr.mxu0 0.0
        %951 = vmatpush1.msra.mxu0 %v924
        %952 = vmatprep.subr.mxu0 0.0
        %953 = vmatpush1.msra.mxu0 %v923
        %954 = vmatprep.subr.mxu0 0.0
        %955 = vmatpush1.msra.mxu0 %v922
        %956 = vmatprep.subr.mxu0 0.0
        %957 = vmatpush1.msra.mxu0 %v921
        %958 = vmatprep.subr.mxu0 0.0
        %959 = vmatpush1.msra.mxu0 %v920
        %960 = vmatprep.subr.mxu0 0.0
        %961 = vmatpush1.msra.mxu0 %v919
        %962 = vmatprep.subr.mxu0 0.0
        %963 = vmatpush1.msra.mxu0 %v918
        %964 = vmatprep.subr.mxu0 0.0
        %965 = vmatpush1.msra.mxu0 %v917
        %966 = vmatprep.subr.mxu0 0.0
        %967 = vmatpush1.msra.mxu0 %v916
        %968 = vmatprep.subr.mxu0 0.0
        %969 = vmatpush1.msra.mxu0 %v915
        %970 = vmatprep.subr.mxu0 0.0
        %971 = vmatpush2.msra.mxu0 0.0
        %972 = vmatprep.subr.mxu0 0.0
        %973 = vmatpush2.msra.mxu0 0.0
        %974 = vmatprep.subr.mxu0 0.0
        %975 = vmatpush2.msra.mxu0 0.0
        %976 = vmatprep.subr.mxu0 0.0
        %977 = vmatpush2.msra.mxu0 0.0
        %978 = vmatprep.subr.mxu0 0.0
        %979 = vmatpush2.msra.mxu0 0.0
        %980 = vmatprep.subr.mxu0 0.0
        %981 = vmatpush2.msra.mxu0 0.0
        %982 = vmatprep.subr.mxu0 0.0
        %983 = vmatpush2.msra.mxu0 0.0
        %984 = vmatprep.subr.mxu0 0.0
        %985 = vmatpush2.msra.mxu0 0.0
        %986 = vmatprep.subr.mxu0 0.0
        %987 = vmatpush2.msra.mxu0 0.0
        %988 = vmatprep.subr.mxu0 0.0
        %989 = vmatpush2.msra.mxu0 0.0
        %990 = vmatprep.subr.mxu0 0.0
        %991 = vmatpush2.msra.mxu0 0.0
        %992 = vmatprep.subr.mxu0 0.0
        %993 = vmatpush2.msra.mxu0 0.0
        %994 = vmatprep.subr.mxu0 0.0
        %995 = vmatpush2.msra.mxu0 0.0
        %996 = vmatprep.subr.mxu0 0.0
        %997 = vmatpush2.msra.mxu0 0.0
        %998 = vmatprep.subr.mxu0 0.0
        %999 = vmatpush2.msra.mxu0 0.0
        %1000 = vmatprep.subr.mxu0 0.0
        %1001 = vmatpush2.msra.mxu0 0.0
        %1002 = vmatprep.mubr.f32.mxu0 0.0
        %1003 = vmatmul.mubr.f32.gmra.mxu0 %v914
        %v1004 = vpop.f32.mrf.mxu0
        %v1005 = vadd.f32 %v936, %v1004
        %v1006 = vpop.f32.mrf.mxu0
        %1007 = vdwg.mxu0
        %v1008 = vmax.f32 %v1005, 0.0
        %v1009 = vand.u32 2147483647, %v1005
        %v1010 = vsub.f32 0.0, %v1009
        %v1011 = vmul.f32 %v1010, 1.442695
        %v1012 = vpow.pop %v1011
        %v1013 = vadd.f32 %v1012, 1.0
        %v1014 = vlog2.pop %v1013
        %v1015 = vmul.f32 %v1014, 0.6931472
        %v1016 = vmul.f32 -0.5, %v1012
        %v1017 = vadd.f32 %v1016, 1.0
        %v1018 = vmul.f32 %v1017, %v1012
        %v1019 = vand.u32 2147483647, %v1012
        %vm1020 = vcmp.lt.f32.partialorder %v1019, 0.0004427343
        %v1021 = vsel %vm1020, %v1018, %v1015
        %v1022 = vadd.f32 %v1008, %v1021
        %v1023 = vsel %vm729, %v1005, %v1022
        %1024 = vst.msk [vmem:[%s457] sm:$0xff] %vm832, %v1023
        %s1025 = sand.u32 %s323, 1
        %s1026 = scalar_lea.sflag [#allocation3], %s1025
        %s1027 = sand.u32 %s323, 1
        %s1028 = smul.addr %s1027, 8
        %s1029 = scalar_lea.vmem [#allocation2], %s1028
        // Predicated region
        $region73: #{tpu_custom_call.1} parent=71 // pred_check
          %p1030 = pneg %p333
        $region74: #{tpu_custom_call.1} parent=71 // pred_check_branch
          %1032 = sbr.rel (%p1030) target = $region76
        $region75: #{tpu_custom_call.1} parent=71 // pred_region
          %s1034 = ssub.s32 128, 128
          %1035 = vsyncadd %s1026, %s1034
          %s1036 = smul.addr %s27, 128
          %s1037 = scalar_lea.hbm %s13, %s1036
          %s1039 = sshll.u32 %s1029, 4
          %s1040 = int_to_ptr.vmem [resolvable:$true] %s1039
          %1042 = dma.vmem_to_hbm [thread:$0]  %s1040, 128, %s1037, %s1026
        $region76: #{tpu_custom_call.1} parent=71 // pred_fallthru
          _
      $region72: #{tpu_custom_call.1} parent=5 // pred_fallthru
        _
      %p1043 = scmp.le.s32.totalorder 2, %s22
      // Predicated region
      $region77: #{tpu_custom_call.1} parent=5 // pred_check
        %p1044 = pneg %p1043
      $region78: #{tpu_custom_call.1} parent=5 // pred_check_branch
        %1046 = sbr.rel (%p1044) target = $region80
      $region79: #{tpu_custom_call.1} parent=5 // pred_region
        %s1047 = ssub.s32 %s22, 2
        // Predicated region
        $region81: #{tpu_custom_call.1} parent=79 // pred_check
          %p1048 = pneg %p339
        $region82: #{tpu_custom_call.1} parent=79 // pred_check_branch
          %1050 = sbr.rel (%p1048) target = $region84
        $region83: #{tpu_custom_call.1} parent=79 // pred_region
          %s1051 = sand.u32 %s324, 1
          %s1052 = scalar_lea.sflag [#allocation3], %s1051
          %s1053 = sand.u32 %s324, 1
          %s1054 = smul.addr %s1053, 8
          %s1055 = scalar_lea.vmem [#allocation2], %s1054
          %1056 = dma.done %s1052, 128
        $region84: #{tpu_custom_call.1} parent=79 // pred_fallthru
          _
      $region80: #{tpu_custom_call.1} parent=5 // pred_fallthru
        _
    $region6: #{tpu_custom_call.1} parent=1 // loop_footer
      %s26 = sadd.s32 1, %s22
    $region7: #{tpu_custom_call.1} parent=1 // loop_footer_branch
      %21 = sbr.rel target = $region3
    $region8: #{tpu_custom_call.1} parent=1 // loop_exit
      _
    %1057 = vsyncpa [#allocation3], 1
    %s1058 = scalar_lea.sflag [#allocation3], 1
    %1059 = vsyncpa %s1058, 1

</llo_original>
